<compile_context>
chip_gen: v6e
topology: v6e:2x2x1
jax: 0.10.0
libtpu: 0.0.40
codegen_flags: <defaults>
</compile_context>

<pallas_src>
import jax
import jax.numpy as jnp
from jax.experimental import pallas as pl
from jax.experimental.pallas import tpu as pltpu


def _rnn_kernel(x_ref, wxh_ref, bxh_ref, whh_ref, bhh_ref, why_ref, bhy_ref,
                y_ref, h_ref):
    T, N, C = x_ref.shape
    D = whh_ref.shape[0]
    K = why_ref.shape[1]
    f32 = jnp.float32

    # ---- Hoisted, time-parallel input projection: one MXU push for all T. --
    xproj = (jnp.dot(x_ref[...].reshape(T * N, C), wxh_ref[...],
                     preferred_element_type=f32)
             + bxh_ref[...]).reshape(T, N, D)                      # (T, N, D)

    # Loop-invariant reads hoisted off the serial critical path.
    whh = whh_ref[...]                                             # (D, D)
    bhh = bhh_ref[...]                                             # (1, D)

    # ---- Serial recurrence (fully unrolled; only h @ Whh per step). --------
    h = jnp.zeros((N, D), f32)
    for t in range(T):                                             # T is static
        pre = xproj[t] + jnp.dot(h, whh, preferred_element_type=f32) + bhh
        h = jnp.maximum(pre, 0.0)                                  # (N, D)
        h_ref[t] = h

    # ---- Batched output projection: one (T*N, D)@(D, K) matmul. ------------
    y_ref[...] = (jnp.dot(h_ref[...].reshape(T * N, D), why_ref[...],
                          preferred_element_type=f32)
                  + bhy_ref[...]).reshape(T, N, K)


def rnn_forward(x, params):
    """Returns (all_y, all_h) with shapes (T, N, K), (T, N, D)."""
    T, N, C = x.shape
    D = params["whh"].shape[0]
    K = params["why"].shape[1]

    args = (x,
            params["wxh"], params["bxh"],
            params["whh"], params["bhh"],
            params["why"], params["bhy"])
    vmem = lambda: pl.BlockSpec(memory_space=pltpu.MemorySpace.VMEM)

    return pl.pallas_call(
        _rnn_kernel,
        out_shape=(
            jax.ShapeDtypeStruct((T, N, K), jnp.float32),   # all_y
            jax.ShapeDtypeStruct((T, N, D), jnp.float32),   # all_h
        ),
        in_specs=[vmem() for _ in args],
        out_specs=(vmem(), vmem()),
    )(*args)


def rnn_reference(x, params):
    """Pure-JAX reference (full f32 precision) for validation."""
    T, N, C = x.shape
    D = params["whh"].shape[0]
    hi = jax.lax.Precision.HIGHEST

    def step(h, x_t):
        pre = (jnp.dot(x_t, params["wxh"], precision=hi) + params["bxh"]
               + jnp.dot(h, params["whh"], precision=hi) + params["bhh"])
        h = jnp.maximum(pre, 0.0)
        return h, h

    _, all_h = jax.lax.scan(step, jnp.zeros((N, D), jnp.float32), x)
    all_y = jnp.dot(all_h, params["why"], precision=hi) + params["bhy"]
    return all_y, all_h


def init_params(key, C, D, K):
    """Xavier-normal weights ((in, out) layout == PyTorch weight.T), small biases."""
    def xavier(k, shape):
        fan_in, fan_out = shape
        std = (2.0 / (fan_in + fan_out)) ** 0.5
        return std * jax.random.normal(k, shape, jnp.float32)

    ks = jax.random.split(key, 3)
    return {
        "wxh": xavier(ks[0], (C, D)), "bxh": 0.01 * jnp.ones((1, D), jnp.float32),
        "whh": xavier(ks[1], (D, D)), "bhh": 0.01 * jnp.ones((1, D), jnp.float32),
        "why": xavier(ks[2], (D, K)), "bhy": 0.01 * jnp.ones((1, K), jnp.float32),
    }


if __name__ == "__main__":
    # dim_input=C, dim_recurrent=D, dim_output=K; x: (T, N, C)
    T, N, C, D, K = 8, 4, 16, 32, 16
    key = jax.random.PRNGKey(0)
    k_x, k_p = jax.random.split(key)
    x = jax.random.normal(k_x, (T, N, C), jnp.float32)
    params = init_params(k_p, C, D, K)

    y, h = rnn_forward(x, params)
    jax.block_until_ready((y, h))
    assert y.shape == (T, N, K) and h.shape == (T, N, D)

    y_ref, h_ref = rnn_reference(x, params)
    assert jnp.allclose(h, h_ref, atol=1e-3, rtol=1e-3)
    assert jnp.allclose(y, y_ref, atol=1e-3, rtol=1e-3)

    print("KERNEL_OK")
</pallas_src>

<mosaic_0001>
module attributes {stable_mosaic.version = 11 : i64} {
  func.func @_rnn_kernel(%arg0: memref<8x4x16xf32, #tpu.memory_space<vmem>>, %arg1: memref<16x32xf32, #tpu.memory_space<vmem>>, %arg2: memref<1x32xf32, #tpu.memory_space<vmem>>, %arg3: memref<32x32xf32, #tpu.memory_space<vmem>>, %arg4: memref<1x32xf32, #tpu.memory_space<vmem>>, %arg5: memref<32x16xf32, #tpu.memory_space<vmem>>, %arg6: memref<1x16xf32, #tpu.memory_space<vmem>>, %arg7: memref<8x4x16xf32, #tpu.memory_space<vmem>>, %arg8: memref<8x4x32xf32, #tpu.memory_space<vmem>>) attributes {dimension_semantics = [], scalar_prefetch = 0 : i64, scratch_operands = 0 : i64, tpu.core_type = #tpu.core_type<tc>} {
    %c0 = arith.constant 0 : index
    %c0_0 = arith.constant 0 : index
    %c0_1 = arith.constant 0 : index
    %0 = vector.load %arg0[%c0, %c0_0, %c0_1] : memref<8x4x16xf32, #tpu.memory_space<vmem>>, vector<8x4x16xf32>
    %1 = vector.shape_cast %0 : vector<8x4x16xf32> to vector<32x16xf32>
    %c0_2 = arith.constant 0 : index
    %c0_3 = arith.constant 0 : index
    %2 = vector.load %arg1[%c0_2, %c0_3] : memref<16x32xf32, #tpu.memory_space<vmem>>, vector<16x32xf32>
    %cst = arith.constant dense<0.000000e+00> : vector<32x32xf32>
    %3 = tpu.matmul %1, %2, %cst {dimension_numbers = #tpu.dot_dimension_numbers<[1], [0], [0], [1], [0, 0, 1, 1], [], []>} : vector<32x16xf32>, vector<16x32xf32>, vector<32x32xf32> -> vector<32x32xf32>
    %c0_4 = arith.constant 0 : index
    %c0_5 = arith.constant 0 : index
    %4 = vector.load %arg2[%c0_4, %c0_5] : memref<1x32xf32, #tpu.memory_space<vmem>>, vector<1x32xf32>
    %5 = vector.broadcast %4 : vector<1x32xf32> to vector<32x32xf32>
    %6 = arith.addf %3, %5 : vector<32x32xf32>
    %7 = vector.shape_cast %6 : vector<32x32xf32> to vector<8x4x32xf32>
    %c0_6 = arith.constant 0 : index
    %c0_7 = arith.constant 0 : index
    %8 = vector.load %arg3[%c0_6, %c0_7] : memref<32x32xf32, #tpu.memory_space<vmem>>, vector<32x32xf32>
    %c0_8 = arith.constant 0 : index
    %c0_9 = arith.constant 0 : index
    %9 = vector.load %arg4[%c0_8, %c0_9] : memref<1x32xf32, #tpu.memory_space<vmem>>, vector<1x32xf32>
    %cst_10 = arith.constant 0.000000e+00 : f32
    %10 = vector.broadcast %cst_10 : f32 to vector<4x32xf32>
    %11 = vector.extract_strided_slice %7 {offsets = [0, 0, 0], sizes = [1, 4, 32], strides = [1, 1, 1]} : vector<8x4x32xf32> to vector<1x4x32xf32>
    %12 = vector.shape_cast %11 : vector<1x4x32xf32> to vector<4x32xf32>
    %cst_11 = arith.constant dense<0.000000e+00> : vector<4x32xf32>
    %13 = tpu.matmul %10, %8, %cst_11 {dimension_numbers = #tpu.dot_dimension_numbers<[1], [0], [0], [1], [0, 0, 1, 1], [], []>} : vector<4x32xf32>, vector<32x32xf32>, vector<4x32xf32> -> vector<4x32xf32>
    %14 = arith.addf %12, %13 : vector<4x32xf32>
    %15 = vector.broadcast %9 : vector<1x32xf32> to vector<4x32xf32>
    %16 = arith.addf %14, %15 : vector<4x32xf32>
    %cst_12 = arith.constant 0.000000e+00 : f32
    %17 = vector.broadcast %cst_12 : f32 to vector<4x32xf32>
    %18 = arith.maximumf %16, %17 : vector<4x32xf32>
    %c0_13 = arith.constant 0 : index
    %c0_14 = arith.constant 0 : index
    %c0_15 = arith.constant 0 : index
    %19 = vector.load %arg8[%c0_13, %c0_14, %c0_15] : memref<8x4x32xf32, #tpu.memory_space<vmem>>, vector<1x4x32xf32>
    %20 = vector.shape_cast %19 : vector<1x4x32xf32> to vector<4x32xf32>
    %21 = vector.shape_cast %18 : vector<4x32xf32> to vector<1x4x32xf32>
    tpu.vector_store %arg8[%c0_13, %c0_14, %c0_15], %21 {strides = array<i32>} : memref<8x4x32xf32, #tpu.memory_space<vmem>>, vector<1x4x32xf32>,
    %22 = vector.extract_strided_slice %7 {offsets = [1, 0, 0], sizes = [1, 4, 32], strides = [1, 1, 1]} : vector<8x4x32xf32> to vector<1x4x32xf32>
    %23 = vector.shape_cast %22 : vector<1x4x32xf32> to vector<4x32xf32>
    %cst_16 = arith.constant dense<0.000000e+00> : vector<4x32xf32>
    %24 = tpu.matmul %18, %8, %cst_16 {dimension_numbers = #tpu.dot_dimension_numbers<[1], [0], [0], [1], [0, 0, 1, 1], [], []>} : vector<4x32xf32>, vector<32x32xf32>, vector<4x32xf32> -> vector<4x32xf32>
    %25 = arith.addf %23, %24 : vector<4x32xf32>
    %26 = vector.broadcast %9 : vector<1x32xf32> to vector<4x32xf32>
    %27 = arith.addf %25, %26 : vector<4x32xf32>
    %cst_17 = arith.constant 0.000000e+00 : f32
    %28 = vector.broadcast %cst_17 : f32 to vector<4x32xf32>
    %29 = arith.maximumf %27, %28 : vector<4x32xf32>
    %c1 = arith.constant 1 : index
    %c0_18 = arith.constant 0 : index
    %c0_19 = arith.constant 0 : index
    %30 = vector.load %arg8[%c1, %c0_18, %c0_19] : memref<8x4x32xf32, #tpu.memory_space<vmem>>, vector<1x4x32xf32>
    %31 = vector.shape_cast %30 : vector<1x4x32xf32> to vector<4x32xf32>
    %32 = vector.shape_cast %29 : vector<4x32xf32> to vector<1x4x32xf32>
    tpu.vector_store %arg8[%c1, %c0_18, %c0_19], %32 {strides = array<i32>} : memref<8x4x32xf32, #tpu.memory_space<vmem>>, vector<1x4x32xf32>,
    %33 = vector.extract_strided_slice %7 {offsets = [2, 0, 0], sizes = [1, 4, 32], strides = [1, 1, 1]} : vector<8x4x32xf32> to vector<1x4x32xf32>
    %34 = vector.shape_cast %33 : vector<1x4x32xf32> to vector<4x32xf32>
    %cst_20 = arith.constant dense<0.000000e+00> : vector<4x32xf32>
    %35 = tpu.matmul %29, %8, %cst_20 {dimension_numbers = #tpu.dot_dimension_numbers<[1], [0], [0], [1], [0, 0, 1, 1], [], []>} : vector<4x32xf32>, vector<32x32xf32>, vector<4x32xf32> -> vector<4x32xf32>
    %36 = arith.addf %34, %35 : vector<4x32xf32>
    %37 = vector.broadcast %9 : vector<1x32xf32> to vector<4x32xf32>
    %38 = arith.addf %36, %37 : vector<4x32xf32>
    %cst_21 = arith.constant 0.000000e+00 : f32
    %39 = vector.broadcast %cst_21 : f32 to vector<4x32xf32>
    %40 = arith.maximumf %38, %39 : vector<4x32xf32>
    %c2 = arith.constant 2 : index
    %c0_22 = arith.constant 0 : index
    %c0_23 = arith.constant 0 : index
    %41 = vector.load %arg8[%c2, %c0_22, %c0_23] : memref<8x4x32xf32, #tpu.memory_space<vmem>>, vector<1x4x32xf32>
    %42 = vector.shape_cast %41 : vector<1x4x32xf32> to vector<4x32xf32>
    %43 = vector.shape_cast %40 : vector<4x32xf32> to vector<1x4x32xf32>
    tpu.vector_store %arg8[%c2, %c0_22, %c0_23], %43 {strides = array<i32>} : memref<8x4x32xf32, #tpu.memory_space<vmem>>, vector<1x4x32xf32>,
    %44 = vector.extract_strided_slice %7 {offsets = [3, 0, 0], sizes = [1, 4, 32], strides = [1, 1, 1]} : vector<8x4x32xf32> to vector<1x4x32xf32>
    %45 = vector.shape_cast %44 : vector<1x4x32xf32> to vector<4x32xf32>
    %cst_24 = arith.constant dense<0.000000e+00> : vector<4x32xf32>
    %46 = tpu.matmul %40, %8, %cst_24 {dimension_numbers = #tpu.dot_dimension_numbers<[1], [0], [0], [1], [0, 0, 1, 1], [], []>} : vector<4x32xf32>, vector<32x32xf32>, vector<4x32xf32> -> vector<4x32xf32>
    %47 = arith.addf %45, %46 : vector<4x32xf32>
    %48 = vector.broadcast %9 : vector<1x32xf32> to vector<4x32xf32>
    %49 = arith.addf %47, %48 : vector<4x32xf32>
    %cst_25 = arith.constant 0.000000e+00 : f32
    %50 = vector.broadcast %cst_25 : f32 to vector<4x32xf32>
    %51 = arith.maximumf %49, %50 : vector<4x32xf32>
    %c3 = arith.constant 3 : index
    %c0_26 = arith.constant 0 : index
    %c0_27 = arith.constant 0 : index
    %52 = vector.load %arg8[%c3, %c0_26, %c0_27] : memref<8x4x32xf32, #tpu.memory_space<vmem>>, vector<1x4x32xf32>
    %53 = vector.shape_cast %52 : vector<1x4x32xf32> to vector<4x32xf32>
    %54 = vector.shape_cast %51 : vector<4x32xf32> to vector<1x4x32xf32>
    tpu.vector_store %arg8[%c3, %c0_26, %c0_27], %54 {strides = array<i32>} : memref<8x4x32xf32, #tpu.memory_space<vmem>>, vector<1x4x32xf32>,
    %55 = vector.extract_strided_slice %7 {offsets = [4, 0, 0], sizes = [1, 4, 32], strides = [1, 1, 1]} : vector<8x4x32xf32> to vector<1x4x32xf32>
    %56 = vector.shape_cast %55 : vector<1x4x32xf32> to vector<4x32xf32>
    %cst_28 = arith.constant dense<0.000000e+00> : vector<4x32xf32>
    %57 = tpu.matmul %51, %8, %cst_28 {dimension_numbers = #tpu.dot_dimension_numbers<[1], [0], [0], [1], [0, 0, 1, 1], [], []>} : vector<4x32xf32>, vector<32x32xf32>, vector<4x32xf32> -> vector<4x32xf32>
    %58 = arith.addf %56, %57 : vector<4x32xf32>
    %59 = vector.broadcast %9 : vector<1x32xf32> to vector<4x32xf32>
    %60 = arith.addf %58, %59 : vector<4x32xf32>
    %cst_29 = arith.constant 0.000000e+00 : f32
    %61 = vector.broadcast %cst_29 : f32 to vector<4x32xf32>
    %62 = arith.maximumf %60, %61 : vector<4x32xf32>
    %c4 = arith.constant 4 : index
    %c0_30 = arith.constant 0 : index
    %c0_31 = arith.constant 0 : index
    %63 = vector.load %arg8[%c4, %c0_30, %c0_31] : memref<8x4x32xf32, #tpu.memory_space<vmem>>, vector<1x4x32xf32>
    %64 = vector.shape_cast %63 : vector<1x4x32xf32> to vector<4x32xf32>
    %65 = vector.shape_cast %62 : vector<4x32xf32> to vector<1x4x32xf32>
    tpu.vector_store %arg8[%c4, %c0_30, %c0_31], %65 {strides = array<i32>} : memref<8x4x32xf32, #tpu.memory_space<vmem>>, vector<1x4x32xf32>,
    %66 = vector.extract_strided_slice %7 {offsets = [5, 0, 0], sizes = [1, 4, 32], strides = [1, 1, 1]} : vector<8x4x32xf32> to vector<1x4x32xf32>
    %67 = vector.shape_cast %66 : vector<1x4x32xf32> to vector<4x32xf32>
    %cst_32 = arith.constant dense<0.000000e+00> : vector<4x32xf32>
    %68 = tpu.matmul %62, %8, %cst_32 {dimension_numbers = #tpu.dot_dimension_numbers<[1], [0], [0], [1], [0, 0, 1, 1], [], []>} : vector<4x32xf32>, vector<32x32xf32>, vector<4x32xf32> -> vector<4x32xf32>
    %69 = arith.addf %67, %68 : vector<4x32xf32>
    %70 = vector.broadcast %9 : vector<1x32xf32> to vector<4x32xf32>
    %71 = arith.addf %69, %70 : vector<4x32xf32>
    %cst_33 = arith.constant 0.000000e+00 : f32
    %72 = vector.broadcast %cst_33 : f32 to vector<4x32xf32>
    %73 = arith.maximumf %71, %72 : vector<4x32xf32>
    %c5 = arith.constant 5 : index
    %c0_34 = arith.constant 0 : index
    %c0_35 = arith.constant 0 : index
    %74 = vector.load %arg8[%c5, %c0_34, %c0_35] : memref<8x4x32xf32, #tpu.memory_space<vmem>>, vector<1x4x32xf32>
    %75 = vector.shape_cast %74 : vector<1x4x32xf32> to vector<4x32xf32>
    %76 = vector.shape_cast %73 : vector<4x32xf32> to vector<1x4x32xf32>
    tpu.vector_store %arg8[%c5, %c0_34, %c0_35], %76 {strides = array<i32>} : memref<8x4x32xf32, #tpu.memory_space<vmem>>, vector<1x4x32xf32>,
    %77 = vector.extract_strided_slice %7 {offsets = [6, 0, 0], sizes = [1, 4, 32], strides = [1, 1, 1]} : vector<8x4x32xf32> to vector<1x4x32xf32>
    %78 = vector.shape_cast %77 : vector<1x4x32xf32> to vector<4x32xf32>
    %cst_36 = arith.constant dense<0.000000e+00> : vector<4x32xf32>
    %79 = tpu.matmul %73, %8, %cst_36 {dimension_numbers = #tpu.dot_dimension_numbers<[1], [0], [0], [1], [0, 0, 1, 1], [], []>} : vector<4x32xf32>, vector<32x32xf32>, vector<4x32xf32> -> vector<4x32xf32>
    %80 = arith.addf %78, %79 : vector<4x32xf32>
    %81 = vector.broadcast %9 : vector<1x32xf32> to vector<4x32xf32>
    %82 = arith.addf %80, %81 : vector<4x32xf32>
    %cst_37 = arith.constant 0.000000e+00 : f32
    %83 = vector.broadcast %cst_37 : f32 to vector<4x32xf32>
    %84 = arith.maximumf %82, %83 : vector<4x32xf32>
    %c6 = arith.constant 6 : index
    %c0_38 = arith.constant 0 : index
    %c0_39 = arith.constant 0 : index
    %85 = vector.load %arg8[%c6, %c0_38, %c0_39] : memref<8x4x32xf32, #tpu.memory_space<vmem>>, vector<1x4x32xf32>
    %86 = vector.shape_cast %85 : vector<1x4x32xf32> to vector<4x32xf32>
    %87 = vector.shape_cast %84 : vector<4x32xf32> to vector<1x4x32xf32>
    tpu.vector_store %arg8[%c6, %c0_38, %c0_39], %87 {strides = array<i32>} : memref<8x4x32xf32, #tpu.memory_space<vmem>>, vector<1x4x32xf32>,
    %88 = vector.extract_strided_slice %7 {offsets = [7, 0, 0], sizes = [1, 4, 32], strides = [1, 1, 1]} : vector<8x4x32xf32> to vector<1x4x32xf32>
    %89 = vector.shape_cast %88 : vector<1x4x32xf32> to vector<4x32xf32>
    %cst_40 = arith.constant dense<0.000000e+00> : vector<4x32xf32>
    %90 = tpu.matmul %84, %8, %cst_40 {dimension_numbers = #tpu.dot_dimension_numbers<[1], [0], [0], [1], [0, 0, 1, 1], [], []>} : vector<4x32xf32>, vector<32x32xf32>, vector<4x32xf32> -> vector<4x32xf32>
    %91 = arith.addf %89, %90 : vector<4x32xf32>
    %92 = vector.broadcast %9 : vector<1x32xf32> to vector<4x32xf32>
    %93 = arith.addf %91, %92 : vector<4x32xf32>
    %cst_41 = arith.constant 0.000000e+00 : f32
    %94 = vector.broadcast %cst_41 : f32 to vector<4x32xf32>
    %95 = arith.maximumf %93, %94 : vector<4x32xf32>
    %c7 = arith.constant 7 : index
    %c0_42 = arith.constant 0 : index
    %c0_43 = arith.constant 0 : index
    %96 = vector.load %arg8[%c7, %c0_42, %c0_43] : memref<8x4x32xf32, #tpu.memory_space<vmem>>, vector<1x4x32xf32>
    %97 = vector.shape_cast %96 : vector<1x4x32xf32> to vector<4x32xf32>
    %98 = vector.shape_cast %95 : vector<4x32xf32> to vector<1x4x32xf32>
    tpu.vector_store %arg8[%c7, %c0_42, %c0_43], %98 {strides = array<i32>} : memref<8x4x32xf32, #tpu.memory_space<vmem>>, vector<1x4x32xf32>,
    %c0_44 = arith.constant 0 : index
    %c0_45 = arith.constant 0 : index
    %c0_46 = arith.constant 0 : index
    %99 = vector.load %arg8[%c0_44, %c0_45, %c0_46] : memref<8x4x32xf32, #tpu.memory_space<vmem>>, vector<8x4x32xf32>
    %100 = vector.shape_cast %99 : vector<8x4x32xf32> to vector<32x32xf32>
    %c0_47 = arith.constant 0 : index
    %c0_48 = arith.constant 0 : index
    %101 = vector.load %arg5[%c0_47, %c0_48] : memref<32x16xf32, #tpu.memory_space<vmem>>, vector<32x16xf32>
    %cst_49 = arith.constant dense<0.000000e+00> : vector<32x16xf32>
    %102 = tpu.matmul %100, %101, %cst_49 {dimension_numbers = #tpu.dot_dimension_numbers<[1], [0], [0], [1], [0, 0, 1, 1], [], []>} : vector<32x32xf32>, vector<32x16xf32>, vector<32x16xf32> -> vector<32x16xf32>
    %c0_50 = arith.constant 0 : index
    %c0_51 = arith.constant 0 : index
    %103 = vector.load %arg6[%c0_50, %c0_51] : memref<1x16xf32, #tpu.memory_space<vmem>>, vector<1x16xf32>
    %104 = vector.broadcast %103 : vector<1x16xf32> to vector<32x16xf32>
    %105 = arith.addf %102, %104 : vector<32x16xf32>
    %106 = vector.shape_cast %105 : vector<32x16xf32> to vector<8x4x16xf32>
    %c0_52 = arith.constant 0 : index
    %c0_53 = arith.constant 0 : index
    %c0_54 = arith.constant 0 : index
    %107 = vector.load %arg7[%c0_52, %c0_53, %c0_54] : memref<8x4x16xf32, #tpu.memory_space<vmem>>, vector<8x4x16xf32>
    tpu.vector_store %arg7[%c0_52, %c0_53, %c0_54], %106 {strides = array<i32>} : memref<8x4x16xf32, #tpu.memory_space<vmem>>, vector<8x4x16xf32>,
    return
  }
}

</mosaic_0001>

<llo_original>
// kernel: tpu_custom_call.1
$region0: #{tpu_custom_call.1}
  #allocation0 [shape = 'u32[]', space=smem, size = 0x4, offset = 0x4, fixed_abs, tag = 'smem constant byte address 0x4 - core index']
  #allocation1 [shape = 'u32[144,128]{1,0:T(1,128)}', space=vmem, size = 0x12000, scoped, tag = 'internal scratch']
  %s0 = inlined_call_operand.vmem [shape: f32[8,4,16], index: 0, kind: input, shape index: {}]
  %s1 = inlined_call_operand.vmem [shape: f32[16,32], index: 1, kind: input, shape index: {}]
  %s2 = inlined_call_operand.vmem [shape: f32[1,32], index: 2, kind: input, shape index: {}]
  %s3 = inlined_call_operand.hbm [shape: f32[32,32], index: 3, kind: input, shape index: {}]
  %s4 = inlined_call_operand.vmem [shape: f32[1,32], index: 4, kind: input, shape index: {}]
  %s5 = inlined_call_operand.vmem [shape: f32[32,16], index: 5, kind: input, shape index: {}]
  %s6 = inlined_call_operand.vmem [shape: f32[1,16], index: 6, kind: input, shape index: {}]
  %s7 = inlined_call_operand.hbm [shape: f32[8,4,16], index: 7, kind: output, shape index: {0}]
  %s8 = inlined_call_operand.hbm [shape: f32[8,4,32], index: 8, kind: output, shape index: {1}]
  %9 = xla_tuple %s7, %s8
  %s10 = sld [smem:[#allocation0]]
  $region50: #{tpu_custom_call.1} parent=0
    _
  %s12 = ssub.s32 1, %s10
  %s13 = scalar_select 0, %s12, %s10
  $region1: #{tpu_custom_call.1} parent=0
    #allocation2 [shape = 'u8[16384]{0}', space=vmem, size = 0x4000, scoped, tag = 'input window, operand 3, single buffered']
    #allocation3 [shape = 's32[1]{0}', space=sflag, size = 0x4, scoped, tag = 'scoped memory for tpu_custom_call.1']
    #allocation4 [shape = 's32[1]{0}', space=sflag, size = 0x4, scoped, tag = 'scoped memory for tpu_custom_call.1']
    #allocation5 [shape = 'u8[16384]{0}', space=vmem, size = 0x4000, scoped, tag = 'output window, operand 0, single buffered']
    #allocation6 [shape = 'u8[16384]{0}', space=vmem, size = 0x4000, scoped, tag = 'output window, operand 1, single buffered']
    #allocation7 [shape = 's32[1]{0}', space=sflag, size = 0x4, scoped, tag = 'scoped memory for tpu_custom_call.1']
    %14 = vsyncpa [#allocation3], 0
    %15 = vsyncpa [#allocation4], 0
    %16 = vsyncpa [#allocation7], 0
    // Predicated region
    $region2: #{tpu_custom_call.1} parent=1 // pred_check
      _
    $region3: #{tpu_custom_call.1} parent=1 // pred_check_branch
      %18 = sbr.rel (0) target = $region5
    $region4: #{tpu_custom_call.1} parent=1 // pred_region
      _
    $region5: #{tpu_custom_call.1} parent=1 // pred_fallthru
      _
    // Predicated region
    $region6: #{tpu_custom_call.1} parent=1 // pred_check
      _
    $region7: #{tpu_custom_call.1} parent=1 // pred_check_branch
      %20 = sbr.rel (0) target = $region9
    $region8: #{tpu_custom_call.1} parent=1 // pred_region
      _
    $region9: #{tpu_custom_call.1} parent=1 // pred_fallthru
      _
    // Predicated region
    $region10: #{tpu_custom_call.1} parent=1 // pred_check
      _
    $region11: #{tpu_custom_call.1} parent=1 // pred_check_branch
      %22 = sbr.rel (0) target = $region13
    $region12: #{tpu_custom_call.1} parent=1 // pred_region
      _
    $region13: #{tpu_custom_call.1} parent=1 // pred_fallthru
      _
    // Predicated region
    $region14: #{tpu_custom_call.1} parent=1 // pred_check
      _
    $region15: #{tpu_custom_call.1} parent=1 // pred_check_branch
      %24 = sbr.rel (0) target = $region17
    $region16: #{tpu_custom_call.1} parent=1 // pred_region
      %s26 = ssub.s32 512, 512
      %27 = vsyncadd [#allocation3], %s26
      %s28 = sshll.u32 [#allocation2], 4
      %s29 = int_to_ptr.vmem [resolvable:$true] %s28
      %34 = dma.hbm_to_vmem [thread:$0]  %s3, 512, %s29, [#allocation3], 128, 128, 8
    $region17: #{tpu_custom_call.1} parent=1 // pred_fallthru
      _
    // Predicated region
    $region18: #{tpu_custom_call.1} parent=1 // pred_check
      _
    $region19: #{tpu_custom_call.1} parent=1 // pred_check_branch
      %36 = sbr.rel (0) target = $region21
    $region20: #{tpu_custom_call.1} parent=1 // pred_region
      _
    $region21: #{tpu_custom_call.1} parent=1 // pred_fallthru
      _
    // Predicated region
    $region22: #{tpu_custom_call.1} parent=1 // pred_check
      _
    $region23: #{tpu_custom_call.1} parent=1 // pred_check_branch
      %38 = sbr.rel (0) target = $region25
    $region24: #{tpu_custom_call.1} parent=1 // pred_region
      _
    $region25: #{tpu_custom_call.1} parent=1 // pred_fallthru
      _
    // Predicated region
    $region26: #{tpu_custom_call.1} parent=1 // pred_check
      _
    $region27: #{tpu_custom_call.1} parent=1 // pred_check_branch
      %40 = sbr.rel (0) target = $region29
    $region28: #{tpu_custom_call.1} parent=1 // pred_region
      _
    $region29: #{tpu_custom_call.1} parent=1 // pred_fallthru
      _
    // Predicated region
    $region30: #{tpu_custom_call.1} parent=1 // pred_check
      _
    $region31: #{tpu_custom_call.1} parent=1 // pred_check_branch
      %42 = sbr.rel (0) target = $region33
    $region32: #{tpu_custom_call.1} parent=1 // pred_region
      %43 = dma.done [#allocation3], 512
    $region33: #{tpu_custom_call.1} parent=1 // pred_fallthru
      _
    %v44 = vld [vmem:[%s0] sm:$0xf]
    %v45 = vld [vmem:[%s0 + $0x4] sm:$0xf]
    %v46 = vld [vmem:[%s0 + $0x8] sm:$0xf]
    %v47 = vld [vmem:[%s0 + $0xc] sm:$0xf]
    %v48 = vld [vmem:[%s0 + $0x10] sm:$0xf]
    %v49 = vld [vmem:[%s0 + $0x14] sm:$0xf]
    %v50 = vld [vmem:[%s0 + $0x18] sm:$0xf]
    %v51 = vld [vmem:[%s0 + $0x1c] sm:$0xf]
    %v52 = vld [vmem:[%s1] sm:$0xff]
    %v53 = vld [vmem:[%s1 + $0x8] sm:$0xff]
    %v54 = vld [vmem:[%s2] sm:$0x1]
    %v56 = vlaneseq
    %v57 = vshrl.u32 %v56, 7
    %v58 = vsub.s32 0, %v57
    %v59 = vrot.slane %v54, %v58
    %v69 = vcombine.low %v44, %v45
    %v70 = vcombine.low %v46, %v47
    %v71 = vcombine.low %v48, %v49
    %v72 = vcombine.low %v50, %v51
    %vm73 = vcmask 130048
    %v74 = vsel %vm73, %v69, 0
    %v76 = vsel %vm73, %v70, 0
    %v78 = vsel %vm73, %v71, 0
    %v80 = vsel %vm73, %v72, 0
    %82 = vmatprep.subr.mxu0 0.0
    %83 = vmatpush1.msra.mxu0 0.0
    %84 = vmatprep.subr.mxu0 0.0
    %85 = vmatpush1.msra.mxu0 0.0
    %86 = vmatprep.subr.mxu0 0.0
    %87 = vmatpush1.msra.mxu0 0.0
    %88 = vmatprep.subr.mxu0 0.0
    %89 = vmatpush1.msra.mxu0 0.0
    %90 = vmatprep.subr.mxu0 0.0
    %91 = vmatpush1.msra.mxu0 0.0
    %92 = vmatprep.subr.mxu0 0.0
    %93 = vmatpush1.msra.mxu0 0.0
    %94 = vmatprep.subr.mxu0 0.0
    %95 = vmatpush1.msra.mxu0 0.0
    %96 = vmatprep.subr.mxu0 0.0
    %97 = vmatpush1.msra.mxu0 0.0
    %98 = vmatprep.subr.mxu0 0.0
    %99 = vmatpush1.msra.mxu0 0.0
    %100 = vmatprep.subr.mxu0 0.0
    %101 = vmatpush1.msra.mxu0 0.0
    %102 = vmatprep.subr.mxu0 0.0
    %103 = vmatpush1.msra.mxu0 0.0
    %104 = vmatprep.subr.mxu0 0.0
    %105 = vmatpush1.msra.mxu0 0.0
    %106 = vmatprep.subr.mxu0 0.0
    %107 = vmatpush1.msra.mxu0 0.0
    %108 = vmatprep.subr.mxu0 0.0
    %109 = vmatpush1.msra.mxu0 0.0
    %110 = vmatprep.subr.mxu0 0.0
    %111 = vmatpush1.msra.mxu0 %v53
    %112 = vmatprep.subr.mxu0 0.0
    %113 = vmatpush1.msra.mxu0 %v52
    %114 = vmatprep.subr.mxu0 0.0
    %115 = vmatpush2.msra.mxu0 0.0
    %116 = vmatprep.subr.mxu0 0.0
    %117 = vmatpush2.msra.mxu0 0.0
    %118 = vmatprep.subr.mxu0 0.0
    %119 = vmatpush2.msra.mxu0 0.0
    %120 = vmatprep.subr.mxu0 0.0
    %121 = vmatpush2.msra.mxu0 0.0
    %122 = vmatprep.subr.mxu0 0.0
    %123 = vmatpush2.msra.mxu0 0.0
    %124 = vmatprep.subr.mxu0 0.0
    %125 = vmatpush2.msra.mxu0 0.0
    %126 = vmatprep.subr.mxu0 0.0
    %127 = vmatpush2.msra.mxu0 0.0
    %128 = vmatprep.subr.mxu0 0.0
    %129 = vmatpush2.msra.mxu0 0.0
    %130 = vmatprep.subr.mxu0 0.0
    %131 = vmatpush2.msra.mxu0 0.0
    %132 = vmatprep.subr.mxu0 0.0
    %133 = vmatpush2.msra.mxu0 0.0
    %134 = vmatprep.subr.mxu0 0.0
    %135 = vmatpush2.msra.mxu0 0.0
    %136 = vmatprep.subr.mxu0 0.0
    %137 = vmatpush2.msra.mxu0 0.0
    %138 = vmatprep.subr.mxu0 0.0
    %139 = vmatpush2.msra.mxu0 0.0
    %140 = vmatprep.subr.mxu0 0.0
    %141 = vmatpush2.msra.mxu0 0.0
    %142 = vmatprep.subr.mxu0 0.0
    %143 = vmatpush2.msra.mxu0 0.0
    %144 = vmatprep.subr.mxu0 0.0
    %145 = vmatpush2.msra.mxu0 0.0
    %146 = vmatprep.mubr.f32.mxu0 0.0
    %147 = vmatmul.mubr.f32.gmra.mxu0 %v74
    %v148 = vpop.f32.mrf.mxu0
    %v149 = vadd.f32 %v59, %v148
    %v150 = vpop.f32.mrf.mxu0
    %151 = vmatprep.mubr.f32.mxu0 0.0
    %152 = vmatmul.mubr.f32.gmra.mxu0 %v76
    %v153 = vpop.f32.mrf.mxu0
    %v154 = vadd.f32 %v59, %v153
    %v155 = vpop.f32.mrf.mxu0
    %156 = vmatprep.mubr.f32.mxu0 0.0
    %157 = vmatmul.mubr.f32.gmra.mxu0 %v78
    %v158 = vpop.f32.mrf.mxu0
    %v159 = vadd.f32 %v59, %v158
    %v160 = vpop.f32.mrf.mxu0
    %161 = vmatprep.mubr.f32.mxu0 0.0
    %162 = vmatmul.mubr.f32.gmra.mxu0 %v80
    %v163 = vpop.f32.mrf.mxu0
    %v164 = vadd.f32 %v59, %v163
    %v165 = vpop.f32.mrf.mxu0
    %166 = vdwg.mxu0
    %v171 = vcombine.high %v149, %v149
    %v172 = vcombine.high %v154, %v154
    %v173 = vcombine.high %v159, %v159
    %v174 = vcombine.high %v164, %v164
    %v179 = vld [vmem:[#allocation2] sm:$0xff]
    %v180 = vld [vmem:[#allocation2 + $0x8] sm:$0xff]
    %v181 = vld [vmem:[#allocation2 + $0x10] sm:$0xff]
    %v182 = vld [vmem:[#allocation2 + $0x18] sm:$0xff]
    %v183 = vld [vmem:[%s4] sm:$0x1]
    %vm184 = vcmask 261120
    %v186 = vsel %vm184, 0.0, 0
    %188 = vmatprep.subr.mxu0 0.0
    %189 = vmatpush1.msra.mxu0 0.0
    %190 = vmatprep.subr.mxu0 0.0
    %191 = vmatpush1.msra.mxu0 0.0
    %192 = vmatprep.subr.mxu0 0.0
    %193 = vmatpush1.msra.mxu0 0.0
    %194 = vmatprep.subr.mxu0 0.0
    %195 = vmatpush1.msra.mxu0 0.0
    %196 = vmatprep.subr.mxu0 0.0
    %197 = vmatpush1.msra.mxu0 0.0
    %198 = vmatprep.subr.mxu0 0.0
    %199 = vmatpush1.msra.mxu0 0.0
    %200 = vmatprep.subr.mxu0 0.0
    %201 = vmatpush1.msra.mxu0 0.0
    %202 = vmatprep.subr.mxu0 0.0
    %203 = vmatpush1.msra.mxu0 0.0
    %204 = vmatprep.subr.mxu0 0.0
    %205 = vmatpush1.msra.mxu0 0.0
    %206 = vmatprep.subr.mxu0 0.0
    %207 = vmatpush1.msra.mxu0 0.0
    %208 = vmatprep.subr.mxu0 0.0
    %209 = vmatpush1.msra.mxu0 0.0
    %210 = vmatprep.subr.mxu0 0.0
    %211 = vmatpush1.msra.mxu0 0.0
    %212 = vmatprep.subr.mxu0 0.0
    %213 = vmatpush1.msra.mxu0 %v182
    %214 = vmatprep.subr.mxu0 0.0
    %215 = vmatpush1.msra.mxu0 %v181
    %216 = vmatprep.subr.mxu0 0.0
    %217 = vmatpush1.msra.mxu0 %v180
    %218 = vmatprep.subr.mxu0 0.0
    %219 = vmatpush1.msra.mxu0 %v179
    %220 = vmatprep.subr.mxu0 0.0
    %221 = vmatpush2.msra.mxu0 0.0
    %222 = vmatprep.subr.mxu0 0.0
    %223 = vmatpush2.msra.mxu0 0.0
    %224 = vmatprep.subr.mxu0 0.0
    %225 = vmatpush2.msra.mxu0 0.0
    %226 = vmatprep.subr.mxu0 0.0
    %227 = vmatpush2.msra.mxu0 0.0
    %228 = vmatprep.subr.mxu0 0.0
    %229 = vmatpush2.msra.mxu0 0.0
    %230 = vmatprep.subr.mxu0 0.0
    %231 = vmatpush2.msra.mxu0 0.0
    %232 = vmatprep.subr.mxu0 0.0
    %233 = vmatpush2.msra.mxu0 0.0
    %234 = vmatprep.subr.mxu0 0.0
    %235 = vmatpush2.msra.mxu0 0.0
    %236 = vmatprep.subr.mxu0 0.0
    %237 = vmatpush2.msra.mxu0 0.0
    %238 = vmatprep.subr.mxu0 0.0
    %239 = vmatpush2.msra.mxu0 0.0
    %240 = vmatprep.subr.mxu0 0.0
    %241 = vmatpush2.msra.mxu0 0.0
    %242 = vmatprep.subr.mxu0 0.0
    %243 = vmatpush2.msra.mxu0 0.0
    %244 = vmatprep.subr.mxu0 0.0
    %245 = vmatpush2.msra.mxu0 0.0
    %246 = vmatprep.subr.mxu0 0.0
    %247 = vmatpush2.msra.mxu0 0.0
    %248 = vmatprep.subr.mxu0 0.0
    %249 = vmatpush2.msra.mxu0 0.0
    %250 = vmatprep.subr.mxu0 0.0
    %251 = vmatpush2.msra.mxu0 0.0
    %252 = vmatprep.mubr.f32.mxu0 0.0
    %253 = vmatmul.mubr.f32.gmra.mxu0 %v186
    %v254 = vpop.f32.mrf.mxu0
    %v255 = vadd.f32 0.0, %v254
    %v256 = vpop.f32.mrf.mxu0
    %257 = vdwg.mxu0
    %v258 = vadd.f32 %v149, %v255
    %v260 = vlaneseq
    %v261 = vshrl.u32 %v260, 7
    %v262 = vsub.s32 0, %v261
    %v263 = vrot.slane %v183, %v262
    %v265 = vadd.f32 %v258, %v263
    %v266 = vmax.f32 %v265, 0.0
    %vm267 = vcmask 257024
    %268 = vst.msk [vmem:[#allocation6] sm:$0xf] %vm267, %v266
    %v270 = vsel %vm184, %v266, 0
    %272 = vmatprep.subr.mxu0 0.0
    %273 = vmatpush1.msra.mxu0 0.0
    %274 = vmatprep.subr.mxu0 0.0
    %275 = vmatpush1.msra.mxu0 0.0
    %276 = vmatprep.subr.mxu0 0.0
    %277 = vmatpush1.msra.mxu0 0.0
    %278 = vmatprep.subr.mxu0 0.0
    %279 = vmatpush1.msra.mxu0 0.0
    %280 = vmatprep.subr.mxu0 0.0
    %281 = vmatpush1.msra.mxu0 0.0
    %282 = vmatprep.subr.mxu0 0.0
    %283 = vmatpush1.msra.mxu0 0.0
    %284 = vmatprep.subr.mxu0 0.0
    %285 = vmatpush1.msra.mxu0 0.0
    %286 = vmatprep.subr.mxu0 0.0
    %287 = vmatpush1.msra.mxu0 0.0
    %288 = vmatprep.subr.mxu0 0.0
    %289 = vmatpush1.msra.mxu0 0.0
    %290 = vmatprep.subr.mxu0 0.0
    %291 = vmatpush1.msra.mxu0 0.0
    %292 = vmatprep.subr.mxu0 0.0
    %293 = vmatpush1.msra.mxu0 0.0
    %294 = vmatprep.subr.mxu0 0.0
    %295 = vmatpush1.msra.mxu0 0.0
    %296 = vmatprep.subr.mxu0 0.0
    %297 = vmatpush1.msra.mxu0 %v182
    %298 = vmatprep.subr.mxu0 0.0
    %299 = vmatpush1.msra.mxu0 %v181
    %300 = vmatprep.subr.mxu0 0.0
    %301 = vmatpush1.msra.mxu0 %v180
    %302 = vmatprep.subr.mxu0 0.0
    %303 = vmatpush1.msra.mxu0 %v179
    %304 = vmatprep.subr.mxu0 0.0
    %305 = vmatpush2.msra.mxu0 0.0
    %306 = vmatprep.subr.mxu0 0.0
    %307 = vmatpush2.msra.mxu0 0.0
    %308 = vmatprep.subr.mxu0 0.0
    %309 = vmatpush2.msra.mxu0 0.0
    %310 = vmatprep.subr.mxu0 0.0
    %311 = vmatpush2.msra.mxu0 0.0
    %312 = vmatprep.subr.mxu0 0.0
    %313 = vmatpush2.msra.mxu0 0.0
    %314 = vmatprep.subr.mxu0 0.0
    %315 = vmatpush2.msra.mxu0 0.0
    %316 = vmatprep.subr.mxu0 0.0
    %317 = vmatpush2.msra.mxu0 0.0
    %318 = vmatprep.subr.mxu0 0.0
    %319 = vmatpush2.msra.mxu0 0.0
    %320 = vmatprep.subr.mxu0 0.0
    %321 = vmatpush2.msra.mxu0 0.0
    %322 = vmatprep.subr.mxu0 0.0
    %323 = vmatpush2.msra.mxu0 0.0
    %324 = vmatprep.subr.mxu0 0.0
    %325 = vmatpush2.msra.mxu0 0.0
    %326 = vmatprep.subr.mxu0 0.0
    %327 = vmatpush2.msra.mxu0 0.0
    %328 = vmatprep.subr.mxu0 0.0
    %329 = vmatpush2.msra.mxu0 0.0
    %330 = vmatprep.subr.mxu0 0.0
    %331 = vmatpush2.msra.mxu0 0.0
    %332 = vmatprep.subr.mxu0 0.0
    %333 = vmatpush2.msra.mxu0 0.0
    %334 = vmatprep.subr.mxu0 0.0
    %335 = vmatpush2.msra.mxu0 0.0
    %336 = vmatprep.mubr.f32.mxu0 0.0
    %337 = vmatmul.mubr.f32.gmra.mxu0 %v270
    %v338 = vpop.f32.mrf.mxu0
    %v339 = vadd.f32 0.0, %v338
    %v340 = vpop.f32.mrf.mxu0
    %341 = vdwg.mxu0
    %v342 = vadd.f32 %v171, %v339
    %v343 = vadd.f32 %v342, %v263
    %v344 = vmax.f32 %v343, 0.0
    %s345 = scalar_lea.vmem [#allocation6], 4
    %346 = vst.msk [vmem:[%s345] sm:$0xf] %vm267, %v344
    %v348 = vsel %vm184, %v344, 0
    %350 = vmatprep.subr.mxu0 0.0
    %351 = vmatpush1.msra.mxu0 0.0
    %352 = vmatprep.subr.mxu0 0.0
    %353 = vmatpush1.msra.mxu0 0.0
    %354 = vmatprep.subr.mxu0 0.0
    %355 = vmatpush1.msra.mxu0 0.0
    %356 = vmatprep.subr.mxu0 0.0
    %357 = vmatpush1.msra.mxu0 0.0
    %358 = vmatprep.subr.mxu0 0.0
    %359 = vmatpush1.msra.mxu0 0.0
    %360 = vmatprep.subr.mxu0 0.0
    %361 = vmatpush1.msra.mxu0 0.0
    %362 = vmatprep.subr.mxu0 0.0
    %363 = vmatpush1.msra.mxu0 0.0
    %364 = vmatprep.subr.mxu0 0.0
    %365 = vmatpush1.msra.mxu0 0.0
    %366 = vmatprep.subr.mxu0 0.0
    %367 = vmatpush1.msra.mxu0 0.0
    %368 = vmatprep.subr.mxu0 0.0
    %369 = vmatpush1.msra.mxu0 0.0
    %370 = vmatprep.subr.mxu0 0.0
    %371 = vmatpush1.msra.mxu0 0.0
    %372 = vmatprep.subr.mxu0 0.0
    %373 = vmatpush1.msra.mxu0 0.0
    %374 = vmatprep.subr.mxu0 0.0
    %375 = vmatpush1.msra.mxu0 %v182
    %376 = vmatprep.subr.mxu0 0.0
    %377 = vmatpush1.msra.mxu0 %v181
    %378 = vmatprep.subr.mxu0 0.0
    %379 = vmatpush1.msra.mxu0 %v180
    %380 = vmatprep.subr.mxu0 0.0
    %381 = vmatpush1.msra.mxu0 %v179
    %382 = vmatprep.subr.mxu0 0.0
    %383 = vmatpush2.msra.mxu0 0.0
    %384 = vmatprep.subr.mxu0 0.0
    %385 = vmatpush2.msra.mxu0 0.0
    %386 = vmatprep.subr.mxu0 0.0
    %387 = vmatpush2.msra.mxu0 0.0
    %388 = vmatprep.subr.mxu0 0.0
    %389 = vmatpush2.msra.mxu0 0.0
    %390 = vmatprep.subr.mxu0 0.0
    %391 = vmatpush2.msra.mxu0 0.0
    %392 = vmatprep.subr.mxu0 0.0
    %393 = vmatpush2.msra.mxu0 0.0
    %394 = vmatprep.subr.mxu0 0.0
    %395 = vmatpush2.msra.mxu0 0.0
    %396 = vmatprep.subr.mxu0 0.0
    %397 = vmatpush2.msra.mxu0 0.0
    %398 = vmatprep.subr.mxu0 0.0
    %399 = vmatpush2.msra.mxu0 0.0
    %400 = vmatprep.subr.mxu0 0.0
    %401 = vmatpush2.msra.mxu0 0.0
    %402 = vmatprep.subr.mxu0 0.0
    %403 = vmatpush2.msra.mxu0 0.0
    %404 = vmatprep.subr.mxu0 0.0
    %405 = vmatpush2.msra.mxu0 0.0
    %406 = vmatprep.subr.mxu0 0.0
    %407 = vmatpush2.msra.mxu0 0.0
    %408 = vmatprep.subr.mxu0 0.0
    %409 = vmatpush2.msra.mxu0 0.0
    %410 = vmatprep.subr.mxu0 0.0
    %411 = vmatpush2.msra.mxu0 0.0
    %412 = vmatprep.subr.mxu0 0.0
    %413 = vmatpush2.msra.mxu0 0.0
    %414 = vmatprep.mubr.f32.mxu0 0.0
    %415 = vmatmul.mubr.f32.gmra.mxu0 %v348
    %v416 = vpop.f32.mrf.mxu0
    %v417 = vadd.f32 0.0, %v416
    %v418 = vpop.f32.mrf.mxu0
    %419 = vdwg.mxu0
    %v420 = vadd.f32 %v154, %v417
    %v421 = vadd.f32 %v420, %v263
    %v422 = vmax.f32 %v421, 0.0
    %s423 = scalar_lea.vmem [#allocation6], 8
    %424 = vst.msk [vmem:[%s423] sm:$0xf] %vm267, %v422
    %v426 = vsel %vm184, %v422, 0
    %428 = vmatprep.subr.mxu0 0.0
    %429 = vmatpush1.msra.mxu0 0.0
    %430 = vmatprep.subr.mxu0 0.0
    %431 = vmatpush1.msra.mxu0 0.0
    %432 = vmatprep.subr.mxu0 0.0
    %433 = vmatpush1.msra.mxu0 0.0
    %434 = vmatprep.subr.mxu0 0.0
    %435 = vmatpush1.msra.mxu0 0.0
    %436 = vmatprep.subr.mxu0 0.0
    %437 = vmatpush1.msra.mxu0 0.0
    %438 = vmatprep.subr.mxu0 0.0
    %439 = vmatpush1.msra.mxu0 0.0
    %440 = vmatprep.subr.mxu0 0.0
    %441 = vmatpush1.msra.mxu0 0.0
    %442 = vmatprep.subr.mxu0 0.0
    %443 = vmatpush1.msra.mxu0 0.0
    %444 = vmatprep.subr.mxu0 0.0
    %445 = vmatpush1.msra.mxu0 0.0
    %446 = vmatprep.subr.mxu0 0.0
    %447 = vmatpush1.msra.mxu0 0.0
    %448 = vmatprep.subr.mxu0 0.0
    %449 = vmatpush1.msra.mxu0 0.0
    %450 = vmatprep.subr.mxu0 0.0
    %451 = vmatpush1.msra.mxu0 0.0
    %452 = vmatprep.subr.mxu0 0.0
    %453 = vmatpush1.msra.mxu0 %v182
    %454 = vmatprep.subr.mxu0 0.0
    %455 = vmatpush1.msra.mxu0 %v181
    %456 = vmatprep.subr.mxu0 0.0
    %457 = vmatpush1.msra.mxu0 %v180
    %458 = vmatprep.subr.mxu0 0.0
    %459 = vmatpush1.msra.mxu0 %v179
    %460 = vmatprep.subr.mxu0 0.0
    %461 = vmatpush2.msra.mxu0 0.0
    %462 = vmatprep.subr.mxu0 0.0
    %463 = vmatpush2.msra.mxu0 0.0
    %464 = vmatprep.subr.mxu0 0.0
    %465 = vmatpush2.msra.mxu0 0.0
    %466 = vmatprep.subr.mxu0 0.0
    %467 = vmatpush2.msra.mxu0 0.0
    %468 = vmatprep.subr.mxu0 0.0
    %469 = vmatpush2.msra.mxu0 0.0
    %470 = vmatprep.subr.mxu0 0.0
    %471 = vmatpush2.msra.mxu0 0.0
    %472 = vmatprep.subr.mxu0 0.0
    %473 = vmatpush2.msra.mxu0 0.0
    %474 = vmatprep.subr.mxu0 0.0
    %475 = vmatpush2.msra.mxu0 0.0
    %476 = vmatprep.subr.mxu0 0.0
    %477 = vmatpush2.msra.mxu0 0.0
    %478 = vmatprep.subr.mxu0 0.0
    %479 = vmatpush2.msra.mxu0 0.0
    %480 = vmatprep.subr.mxu0 0.0
    %481 = vmatpush2.msra.mxu0 0.0
    %482 = vmatprep.subr.mxu0 0.0
    %483 = vmatpush2.msra.mxu0 0.0
    %484 = vmatprep.subr.mxu0 0.0
    %485 = vmatpush2.msra.mxu0 0.0
    %486 = vmatprep.subr.mxu0 0.0
    %487 = vmatpush2.msra.mxu0 0.0
    %488 = vmatprep.subr.mxu0 0.0
    %489 = vmatpush2.msra.mxu0 0.0
    %490 = vmatprep.subr.mxu0 0.0
    %491 = vmatpush2.msra.mxu0 0.0
    %492 = vmatprep.mubr.f32.mxu0 0.0
    %493 = vmatmul.mubr.f32.gmra.mxu0 %v426
    %v494 = vpop.f32.mrf.mxu0
    %v495 = vadd.f32 0.0, %v494
    %v496 = vpop.f32.mrf.mxu0
    %497 = vdwg.mxu0
    %v498 = vadd.f32 %v172, %v495
    %v499 = vadd.f32 %v498, %v263
    %v500 = vmax.f32 %v499, 0.0
    %s501 = scalar_lea.vmem [#allocation6], 12
    %502 = vst.msk [vmem:[%s501] sm:$0xf] %vm267, %v500
    %v504 = vsel %vm184, %v500, 0
    %506 = vmatprep.subr.mxu0 0.0
    %507 = vmatpush1.msra.mxu0 0.0
    %508 = vmatprep.subr.mxu0 0.0
    %509 = vmatpush1.msra.mxu0 0.0
    %510 = vmatprep.subr.mxu0 0.0
    %511 = vmatpush1.msra.mxu0 0.0
    %512 = vmatprep.subr.mxu0 0.0
    %513 = vmatpush1.msra.mxu0 0.0
    %514 = vmatprep.subr.mxu0 0.0
    %515 = vmatpush1.msra.mxu0 0.0
    %516 = vmatprep.subr.mxu0 0.0
    %517 = vmatpush1.msra.mxu0 0.0
    %518 = vmatprep.subr.mxu0 0.0
    %519 = vmatpush1.msra.mxu0 0.0
    %520 = vmatprep.subr.mxu0 0.0
    %521 = vmatpush1.msra.mxu0 0.0
    %522 = vmatprep.subr.mxu0 0.0
    %523 = vmatpush1.msra.mxu0 0.0
    %524 = vmatprep.subr.mxu0 0.0
    %525 = vmatpush1.msra.mxu0 0.0
    %526 = vmatprep.subr.mxu0 0.0
    %527 = vmatpush1.msra.mxu0 0.0
    %528 = vmatprep.subr.mxu0 0.0
    %529 = vmatpush1.msra.mxu0 0.0
    %530 = vmatprep.subr.mxu0 0.0
    %531 = vmatpush1.msra.mxu0 %v182
    %532 = vmatprep.subr.mxu0 0.0
    %533 = vmatpush1.msra.mxu0 %v181
    %534 = vmatprep.subr.mxu0 0.0
    %535 = vmatpush1.msra.mxu0 %v180
    %536 = vmatprep.subr.mxu0 0.0
    %537 = vmatpush1.msra.mxu0 %v179
    %538 = vmatprep.subr.mxu0 0.0
    %539 = vmatpush2.msra.mxu0 0.0
    %540 = vmatprep.subr.mxu0 0.0
    %541 = vmatpush2.msra.mxu0 0.0
    %542 = vmatprep.subr.mxu0 0.0
    %543 = vmatpush2.msra.mxu0 0.0
    %544 = vmatprep.subr.mxu0 0.0
    %545 = vmatpush2.msra.mxu0 0.0
    %546 = vmatprep.subr.mxu0 0.0
    %547 = vmatpush2.msra.mxu0 0.0
    %548 = vmatprep.subr.mxu0 0.0
    %549 = vmatpush2.msra.mxu0 0.0
    %550 = vmatprep.subr.mxu0 0.0
    %551 = vmatpush2.msra.mxu0 0.0
    %552 = vmatprep.subr.mxu0 0.0
    %553 = vmatpush2.msra.mxu0 0.0
    %554 = vmatprep.subr.mxu0 0.0
    %555 = vmatpush2.msra.mxu0 0.0
    %556 = vmatprep.subr.mxu0 0.0
    %557 = vmatpush2.msra.mxu0 0.0
    %558 = vmatprep.subr.mxu0 0.0
    %559 = vmatpush2.msra.mxu0 0.0
    %560 = vmatprep.subr.mxu0 0.0
    %561 = vmatpush2.msra.mxu0 0.0
    %562 = vmatprep.subr.mxu0 0.0
    %563 = vmatpush2.msra.mxu0 0.0
    %564 = vmatprep.subr.mxu0 0.0
    %565 = vmatpush2.msra.mxu0 0.0
    %566 = vmatprep.subr.mxu0 0.0
    %567 = vmatpush2.msra.mxu0 0.0
    %568 = vmatprep.subr.mxu0 0.0
    %569 = vmatpush2.msra.mxu0 0.0
    %570 = vmatprep.mubr.f32.mxu0 0.0
    %571 = vmatmul.mubr.f32.gmra.mxu0 %v504
    %v572 = vpop.f32.mrf.mxu0
    %v573 = vadd.f32 0.0, %v572
    %v574 = vpop.f32.mrf.mxu0
    %575 = vdwg.mxu0
    %v576 = vadd.f32 %v159, %v573
    %v577 = vadd.f32 %v576, %v263
    %v578 = vmax.f32 %v577, 0.0
    %s579 = scalar_lea.vmem [#allocation6], 16
    %580 = vst.msk [vmem:[%s579] sm:$0xf] %vm267, %v578
    %v582 = vsel %vm184, %v578, 0
    %584 = vmatprep.subr.mxu0 0.0
    %585 = vmatpush1.msra.mxu0 0.0
    %586 = vmatprep.subr.mxu0 0.0
    %587 = vmatpush1.msra.mxu0 0.0
    %588 = vmatprep.subr.mxu0 0.0
    %589 = vmatpush1.msra.mxu0 0.0
    %590 = vmatprep.subr.mxu0 0.0
    %591 = vmatpush1.msra.mxu0 0.0
    %592 = vmatprep.subr.mxu0 0.0
    %593 = vmatpush1.msra.mxu0 0.0
    %594 = vmatprep.subr.mxu0 0.0
    %595 = vmatpush1.msra.mxu0 0.0
    %596 = vmatprep.subr.mxu0 0.0
    %597 = vmatpush1.msra.mxu0 0.0
    %598 = vmatprep.subr.mxu0 0.0
    %599 = vmatpush1.msra.mxu0 0.0
    %600 = vmatprep.subr.mxu0 0.0
    %601 = vmatpush1.msra.mxu0 0.0
    %602 = vmatprep.subr.mxu0 0.0
    %603 = vmatpush1.msra.mxu0 0.0
    %604 = vmatprep.subr.mxu0 0.0
    %605 = vmatpush1.msra.mxu0 0.0
    %606 = vmatprep.subr.mxu0 0.0
    %607 = vmatpush1.msra.mxu0 0.0
    %608 = vmatprep.subr.mxu0 0.0
    %609 = vmatpush1.msra.mxu0 %v182
    %610 = vmatprep.subr.mxu0 0.0
    %611 = vmatpush1.msra.mxu0 %v181
    %612 = vmatprep.subr.mxu0 0.0
    %613 = vmatpush1.msra.mxu0 %v180
    %614 = vmatprep.subr.mxu0 0.0
    %615 = vmatpush1.msra.mxu0 %v179
    %616 = vmatprep.subr.mxu0 0.0
    %617 = vmatpush2.msra.mxu0 0.0
    %618 = vmatprep.subr.mxu0 0.0
    %619 = vmatpush2.msra.mxu0 0.0
    %620 = vmatprep.subr.mxu0 0.0
    %621 = vmatpush2.msra.mxu0 0.0
    %622 = vmatprep.subr.mxu0 0.0
    %623 = vmatpush2.msra.mxu0 0.0
    %624 = vmatprep.subr.mxu0 0.0
    %625 = vmatpush2.msra.mxu0 0.0
    %626 = vmatprep.subr.mxu0 0.0
    %627 = vmatpush2.msra.mxu0 0.0
    %628 = vmatprep.subr.mxu0 0.0
    %629 = vmatpush2.msra.mxu0 0.0
    %630 = vmatprep.subr.mxu0 0.0
    %631 = vmatpush2.msra.mxu0 0.0
    %632 = vmatprep.subr.mxu0 0.0
    %633 = vmatpush2.msra.mxu0 0.0
    %634 = vmatprep.subr.mxu0 0.0
    %635 = vmatpush2.msra.mxu0 0.0
    %636 = vmatprep.subr.mxu0 0.0
    %637 = vmatpush2.msra.mxu0 0.0
    %638 = vmatprep.subr.mxu0 0.0
    %639 = vmatpush2.msra.mxu0 0.0
    %640 = vmatprep.subr.mxu0 0.0
    %641 = vmatpush2.msra.mxu0 0.0
    %642 = vmatprep.subr.mxu0 0.0
    %643 = vmatpush2.msra.mxu0 0.0
    %644 = vmatprep.subr.mxu0 0.0
    %645 = vmatpush2.msra.mxu0 0.0
    %646 = vmatprep.subr.mxu0 0.0
    %647 = vmatpush2.msra.mxu0 0.0
    %648 = vmatprep.mubr.f32.mxu0 0.0
    %649 = vmatmul.mubr.f32.gmra.mxu0 %v582
    %v650 = vpop.f32.mrf.mxu0
    %v651 = vadd.f32 0.0, %v650
    %v652 = vpop.f32.mrf.mxu0
    %653 = vdwg.mxu0
    %v654 = vadd.f32 %v173, %v651
    %v655 = vadd.f32 %v654, %v263
    %v656 = vmax.f32 %v655, 0.0
    %s657 = scalar_lea.vmem [#allocation6], 20
    %658 = vst.msk [vmem:[%s657] sm:$0xf] %vm267, %v656
    %v660 = vsel %vm184, %v656, 0
    %662 = vmatprep.subr.mxu0 0.0
    %663 = vmatpush1.msra.mxu0 0.0
    %664 = vmatprep.subr.mxu0 0.0
    %665 = vmatpush1.msra.mxu0 0.0
    %666 = vmatprep.subr.mxu0 0.0
    %667 = vmatpush1.msra.mxu0 0.0
    %668 = vmatprep.subr.mxu0 0.0
    %669 = vmatpush1.msra.mxu0 0.0
    %670 = vmatprep.subr.mxu0 0.0
    %671 = vmatpush1.msra.mxu0 0.0
    %672 = vmatprep.subr.mxu0 0.0
    %673 = vmatpush1.msra.mxu0 0.0
    %674 = vmatprep.subr.mxu0 0.0
    %675 = vmatpush1.msra.mxu0 0.0
    %676 = vmatprep.subr.mxu0 0.0
    %677 = vmatpush1.msra.mxu0 0.0
    %678 = vmatprep.subr.mxu0 0.0
    %679 = vmatpush1.msra.mxu0 0.0
    %680 = vmatprep.subr.mxu0 0.0
    %681 = vmatpush1.msra.mxu0 0.0
    %682 = vmatprep.subr.mxu0 0.0
    %683 = vmatpush1.msra.mxu0 0.0
    %684 = vmatprep.subr.mxu0 0.0
    %685 = vmatpush1.msra.mxu0 0.0
    %686 = vmatprep.subr.mxu0 0.0
    %687 = vmatpush1.msra.mxu0 %v182
    %688 = vmatprep.subr.mxu0 0.0
    %689 = vmatpush1.msra.mxu0 %v181
    %690 = vmatprep.subr.mxu0 0.0
    %691 = vmatpush1.msra.mxu0 %v180
    %692 = vmatprep.subr.mxu0 0.0
    %693 = vmatpush1.msra.mxu0 %v179
    %694 = vmatprep.subr.mxu0 0.0
    %695 = vmatpush2.msra.mxu0 0.0
    %696 = vmatprep.subr.mxu0 0.0
    %697 = vmatpush2.msra.mxu0 0.0
    %698 = vmatprep.subr.mxu0 0.0
    %699 = vmatpush2.msra.mxu0 0.0
    %700 = vmatprep.subr.mxu0 0.0
    %701 = vmatpush2.msra.mxu0 0.0
    %702 = vmatprep.subr.mxu0 0.0
    %703 = vmatpush2.msra.mxu0 0.0
    %704 = vmatprep.subr.mxu0 0.0
    %705 = vmatpush2.msra.mxu0 0.0
    %706 = vmatprep.subr.mxu0 0.0
    %707 = vmatpush2.msra.mxu0 0.0
    %708 = vmatprep.subr.mxu0 0.0
    %709 = vmatpush2.msra.mxu0 0.0
    %710 = vmatprep.subr.mxu0 0.0
    %711 = vmatpush2.msra.mxu0 0.0
    %712 = vmatprep.subr.mxu0 0.0
    %713 = vmatpush2.msra.mxu0 0.0
    %714 = vmatprep.subr.mxu0 0.0
    %715 = vmatpush2.msra.mxu0 0.0
    %716 = vmatprep.subr.mxu0 0.0
    %717 = vmatpush2.msra.mxu0 0.0
    %718 = vmatprep.subr.mxu0 0.0
    %719 = vmatpush2.msra.mxu0 0.0
    %720 = vmatprep.subr.mxu0 0.0
    %721 = vmatpush2.msra.mxu0 0.0
    %722 = vmatprep.subr.mxu0 0.0
    %723 = vmatpush2.msra.mxu0 0.0
    %724 = vmatprep.subr.mxu0 0.0
    %725 = vmatpush2.msra.mxu0 0.0
    %726 = vmatprep.mubr.f32.mxu0 0.0
    %727 = vmatmul.mubr.f32.gmra.mxu0 %v660
    %v728 = vpop.f32.mrf.mxu0
    %v729 = vadd.f32 0.0, %v728
    %v730 = vpop.f32.mrf.mxu0
    %731 = vdwg.mxu0
    %v732 = vadd.f32 %v164, %v729
    %v733 = vadd.f32 %v732, %v263
    %v734 = vmax.f32 %v733, 0.0
    %s735 = scalar_lea.vmem [#allocation6], 24
    %736 = vst.msk [vmem:[%s735] sm:$0xf] %vm267, %v734
    %v738 = vsel %vm184, %v734, 0
    %740 = vmatprep.subr.mxu0 0.0
    %741 = vmatpush1.msra.mxu0 0.0
    %742 = vmatprep.subr.mxu0 0.0
    %743 = vmatpush1.msra.mxu0 0.0
    %744 = vmatprep.subr.mxu0 0.0
    %745 = vmatpush1.msra.mxu0 0.0
    %746 = vmatprep.subr.mxu0 0.0
    %747 = vmatpush1.msra.mxu0 0.0
    %748 = vmatprep.subr.mxu0 0.0
    %749 = vmatpush1.msra.mxu0 0.0
    %750 = vmatprep.subr.mxu0 0.0
    %751 = vmatpush1.msra.mxu0 0.0
    %752 = vmatprep.subr.mxu0 0.0
    %753 = vmatpush1.msra.mxu0 0.0
    %754 = vmatprep.subr.mxu0 0.0
    %755 = vmatpush1.msra.mxu0 0.0
    %756 = vmatprep.subr.mxu0 0.0
    %757 = vmatpush1.msra.mxu0 0.0
    %758 = vmatprep.subr.mxu0 0.0
    %759 = vmatpush1.msra.mxu0 0.0
    %760 = vmatprep.subr.mxu0 0.0
    %761 = vmatpush1.msra.mxu0 0.0
    %762 = vmatprep.subr.mxu0 0.0
    %763 = vmatpush1.msra.mxu0 0.0
    %764 = vmatprep.subr.mxu0 0.0
    %765 = vmatpush1.msra.mxu0 %v182
    %766 = vmatprep.subr.mxu0 0.0
    %767 = vmatpush1.msra.mxu0 %v181
    %768 = vmatprep.subr.mxu0 0.0
    %769 = vmatpush1.msra.mxu0 %v180
    %770 = vmatprep.subr.mxu0 0.0
    %771 = vmatpush1.msra.mxu0 %v179
    %772 = vmatprep.subr.mxu0 0.0
    %773 = vmatpush2.msra.mxu0 0.0
    %774 = vmatprep.subr.mxu0 0.0
    %775 = vmatpush2.msra.mxu0 0.0
    %776 = vmatprep.subr.mxu0 0.0
    %777 = vmatpush2.msra.mxu0 0.0
    %778 = vmatprep.subr.mxu0 0.0
    %779 = vmatpush2.msra.mxu0 0.0
    %780 = vmatprep.subr.mxu0 0.0
    %781 = vmatpush2.msra.mxu0 0.0
    %782 = vmatprep.subr.mxu0 0.0
    %783 = vmatpush2.msra.mxu0 0.0
    %784 = vmatprep.subr.mxu0 0.0
    %785 = vmatpush2.msra.mxu0 0.0
    %786 = vmatprep.subr.mxu0 0.0
    %787 = vmatpush2.msra.mxu0 0.0
    %788 = vmatprep.subr.mxu0 0.0
    %789 = vmatpush2.msra.mxu0 0.0
    %790 = vmatprep.subr.mxu0 0.0
    %791 = vmatpush2.msra.mxu0 0.0
    %792 = vmatprep.subr.mxu0 0.0
    %793 = vmatpush2.msra.mxu0 0.0
    %794 = vmatprep.subr.mxu0 0.0
    %795 = vmatpush2.msra.mxu0 0.0
    %796 = vmatprep.subr.mxu0 0.0
    %797 = vmatpush2.msra.mxu0 0.0
    %798 = vmatprep.subr.mxu0 0.0
    %799 = vmatpush2.msra.mxu0 0.0
    %800 = vmatprep.subr.mxu0 0.0
    %801 = vmatpush2.msra.mxu0 0.0
    %802 = vmatprep.subr.mxu0 0.0
    %803 = vmatpush2.msra.mxu0 0.0
    %804 = vmatprep.mubr.f32.mxu0 0.0
    %805 = vmatmul.mubr.f32.gmra.mxu0 %v738
    %v806 = vpop.f32.mrf.mxu0
    %v807 = vadd.f32 0.0, %v806
    %v808 = vpop.f32.mrf.mxu0
    %809 = vdwg.mxu0
    %v810 = vadd.f32 %v174, %v807
    %v811 = vadd.f32 %v810, %v263
    %v812 = vmax.f32 %v811, 0.0
    %s813 = scalar_lea.vmem [#allocation6], 28
    %814 = vst.msk [vmem:[%s813] sm:$0xf] %vm267, %v812
    %v815 = vld [vmem:[#allocation6] sm:$0xf]
    %v816 = vld [vmem:[#allocation6 + $0x4] sm:$0xf]
    %v817 = vld [vmem:[#allocation6 + $0x8] sm:$0xf]
    %v818 = vld [vmem:[#allocation6 + $0xc] sm:$0xf]
    %v819 = vld [vmem:[#allocation6 + $0x10] sm:$0xf]
    %v820 = vld [vmem:[#allocation6 + $0x14] sm:$0xf]
    %v821 = vld [vmem:[#allocation6 + $0x18] sm:$0xf]
    %v822 = vld [vmem:[#allocation6 + $0x1c] sm:$0xf]
    %v823 = vld [vmem:[%s5] sm:$0xff]
    %v824 = vld [vmem:[%s5 + $0x8] sm:$0xff]
    %v825 = vld [vmem:[%s5 + $0x10] sm:$0xff]
    %v826 = vld [vmem:[%s5 + $0x18] sm:$0xff]
    %v827 = vld [vmem:[%s6] sm:$0x1]
    %v829 = vlaneseq
    %v830 = vshrl.u32 %v829, 7
    %v831 = vsub.s32 0, %v830
    %v832 = vrot.slane %v827, %v831
    %v842 = vcombine.low %v815, %v816
    %v843 = vcombine.low %v817, %v818
    %v844 = vcombine.low %v819, %v820
    %v845 = vcombine.low %v821, %v822
    %v846 = vsel %vm184, %v842, 0
    %v848 = vsel %vm184, %v843, 0
    %v850 = vsel %vm184, %v844, 0
    %v852 = vsel %vm184, %v845, 0
    %854 = vmatprep.subr.mxu0 0.0
    %855 = vmatpush1.msra.mxu0 0.0
    %856 = vmatprep.subr.mxu0 0.0
    %857 = vmatpush1.msra.mxu0 0.0
    %858 = vmatprep.subr.mxu0 0.0
    %859 = vmatpush1.msra.mxu0 0.0
    %860 = vmatprep.subr.mxu0 0.0
    %861 = vmatpush1.msra.mxu0 0.0
    %862 = vmatprep.subr.mxu0 0.0
    %863 = vmatpush1.msra.mxu0 0.0
    %864 = vmatprep.subr.mxu0 0.0
    %865 = vmatpush1.msra.mxu0 0.0
    %866 = vmatprep.subr.mxu0 0.0
    %867 = vmatpush1.msra.mxu0 0.0
    %868 = vmatprep.subr.mxu0 0.0
    %869 = vmatpush1.msra.mxu0 0.0
    %870 = vmatprep.subr.mxu0 0.0
    %871 = vmatpush1.msra.mxu0 0.0
    %872 = vmatprep.subr.mxu0 0.0
    %873 = vmatpush1.msra.mxu0 0.0
    %874 = vmatprep.subr.mxu0 0.0
    %875 = vmatpush1.msra.mxu0 0.0
    %876 = vmatprep.subr.mxu0 0.0
    %877 = vmatpush1.msra.mxu0 0.0
    %878 = vmatprep.subr.mxu0 0.0
    %879 = vmatpush1.msra.mxu0 %v826
    %880 = vmatprep.subr.mxu0 0.0
    %881 = vmatpush1.msra.mxu0 %v825
    %882 = vmatprep.subr.mxu0 0.0
    %883 = vmatpush1.msra.mxu0 %v824
    %884 = vmatprep.subr.mxu0 0.0
    %885 = vmatpush1.msra.mxu0 %v823
    %886 = vmatprep.subr.mxu0 0.0
    %887 = vmatpush2.msra.mxu0 0.0
    %888 = vmatprep.subr.mxu0 0.0
    %889 = vmatpush2.msra.mxu0 0.0
    %890 = vmatprep.subr.mxu0 0.0
    %891 = vmatpush2.msra.mxu0 0.0
    %892 = vmatprep.subr.mxu0 0.0
    %893 = vmatpush2.msra.mxu0 0.0
    %894 = vmatprep.subr.mxu0 0.0
    %895 = vmatpush2.msra.mxu0 0.0
    %896 = vmatprep.subr.mxu0 0.0
    %897 = vmatpush2.msra.mxu0 0.0
    %898 = vmatprep.subr.mxu0 0.0
    %899 = vmatpush2.msra.mxu0 0.0
    %900 = vmatprep.subr.mxu0 0.0
    %901 = vmatpush2.msra.mxu0 0.0
    %902 = vmatprep.subr.mxu0 0.0
    %903 = vmatpush2.msra.mxu0 0.0
    %904 = vmatprep.subr.mxu0 0.0
    %905 = vmatpush2.msra.mxu0 0.0
    %906 = vmatprep.subr.mxu0 0.0
    %907 = vmatpush2.msra.mxu0 0.0
    %908 = vmatprep.subr.mxu0 0.0
    %909 = vmatpush2.msra.mxu0 0.0
    %910 = vmatprep.subr.mxu0 0.0
    %911 = vmatpush2.msra.mxu0 0.0
    %912 = vmatprep.subr.mxu0 0.0
    %913 = vmatpush2.msra.mxu0 0.0
    %914 = vmatprep.subr.mxu0 0.0
    %915 = vmatpush2.msra.mxu0 0.0
    %916 = vmatprep.subr.mxu0 0.0
    %917 = vmatpush2.msra.mxu0 0.0
    %918 = vmatprep.mubr.f32.mxu0 0.0
    %919 = vmatmul.mubr.f32.gmra.mxu0 %v846
    %v920 = vpop.f32.mrf.mxu0
    %v921 = vadd.f32 %v832, %v920
    %v922 = vpop.f32.mrf.mxu0
    %923 = vmatprep.mubr.f32.mxu0 0.0
    %924 = vmatmul.mubr.f32.gmra.mxu0 %v848
    %v925 = vpop.f32.mrf.mxu0
    %v926 = vadd.f32 %v832, %v925
    %v927 = vpop.f32.mrf.mxu0
    %928 = vmatprep.mubr.f32.mxu0 0.0
    %929 = vmatmul.mubr.f32.gmra.mxu0 %v850
    %v930 = vpop.f32.mrf.mxu0
    %v931 = vadd.f32 %v832, %v930
    %v932 = vpop.f32.mrf.mxu0
    %933 = vmatprep.mubr.f32.mxu0 0.0
    %934 = vmatmul.mubr.f32.gmra.mxu0 %v852
    %v935 = vpop.f32.mrf.mxu0
    %v936 = vadd.f32 %v832, %v935
    %v937 = vpop.f32.mrf.mxu0
    %938 = vdwg.mxu0
    %v943 = vcombine.high %v921, %v921
    %v944 = vcombine.high %v926, %v926
    %v945 = vcombine.high %v931, %v931
    %v946 = vcombine.high %v936, %v936
    %vm951 = vcmask 125952
    %952 = vst.msk [vmem:[#allocation5] sm:$0xf] %vm951, %v921
    %953 = vst.msk [vmem:[#allocation5 + $0x4] sm:$0xf] %vm951, %v943
    %954 = vst.msk [vmem:[#allocation5 + $0x8] sm:$0xf] %vm951, %v926
    %955 = vst.msk [vmem:[#allocation5 + $0xc] sm:$0xf] %vm951, %v944
    %956 = vst.msk [vmem:[#allocation5 + $0x10] sm:$0xf] %vm951, %v931
    %957 = vst.msk [vmem:[#allocation5 + $0x14] sm:$0xf] %vm951, %v945
    %958 = vst.msk [vmem:[#allocation5 + $0x18] sm:$0xf] %vm951, %v936
    %959 = vst.msk [vmem:[#allocation5 + $0x1c] sm:$0xf] %vm951, %v946
    // Predicated region
    $region34: #{tpu_custom_call.1} parent=1 // pred_check
      _
    $region35: #{tpu_custom_call.1} parent=1 // pred_check_branch
      %961 = sbr.rel (0) target = $region37
    $region36: #{tpu_custom_call.1} parent=1 // pred_region
      %s963 = ssub.s32 512, 512
      %964 = vsyncadd [#allocation4], %s963
      %s965 = sshll.u32 [#allocation5], 4
      %s966 = int_to_ptr.vmem [resolvable:$true] %s965
      %971 = dma.vmem_to_hbm [thread:$0]  %s966, 512, %s7, [#allocation4], 64, 64, 4
    $region37: #{tpu_custom_call.1} parent=1 // pred_fallthru
      _
    // Predicated region
    $region38: #{tpu_custom_call.1} parent=1 // pred_check
      _
    $region39: #{tpu_custom_call.1} parent=1 // pred_check_branch
      %973 = sbr.rel (0) target = $region41
    $region40: #{tpu_custom_call.1} parent=1 // pred_region
      %s975 = ssub.s32 512, 512
      %976 = vsyncadd [#allocation7], %s975
      %s977 = sshll.u32 [#allocation6], 4
      %s978 = int_to_ptr.vmem [resolvable:$true] %s977
      %983 = dma.vmem_to_hbm [thread:$0]  %s978, 512, %s8, [#allocation7], 64, 64, 4
    $region41: #{tpu_custom_call.1} parent=1 // pred_fallthru
      _
    // Predicated region
    $region42: #{tpu_custom_call.1} parent=1 // pred_check
      _
    $region43: #{tpu_custom_call.1} parent=1 // pred_check_branch
      %985 = sbr.rel (0) target = $region45
    $region44: #{tpu_custom_call.1} parent=1 // pred_region
      %986 = dma.done [#allocation4], 512
    $region45: #{tpu_custom_call.1} parent=1 // pred_fallthru
      _
    // Predicated region
    $region46: #{tpu_custom_call.1} parent=1 // pred_check
      _
    $region47: #{tpu_custom_call.1} parent=1 // pred_check_branch
      %988 = sbr.rel (0) target = $region49
    $region48: #{tpu_custom_call.1} parent=1 // pred_region
      %989 = dma.done [#allocation7], 512
    $region49: #{tpu_custom_call.1} parent=1 // pred_fallthru
      _
    %990 = vsyncpa [#allocation3], 1
    %991 = vsyncpa [#allocation4], 1
    %992 = vsyncpa [#allocation7], 1

</llo_original>
